<compile_context>
chip_gen: v7x
topology: tpu7x:2x2x1
jax: 0.10.0
libtpu: 0.0.40
codegen_flags: <defaults>
</compile_context>

<pallas_src>
import jax
import jax.numpy as jnp
from jax.experimental import pallas as pl
from jax.experimental.pallas import tpu as pltpu


def _round_up(x, m):
    return ((x + m - 1) // m) * m


def _largest_divisor_tile(size, candidates):
    for c in candidates:
        if c <= size and size % c == 0:
            return c
    return size


def _batch_tiling(B, max_single_block=512):
    """Returns (bm, tm): padded batch and M tile.  Avoids large over-padding."""
    if B <= max_single_block:
        return B, B                                  # one full-dim M block, no pad
    bm = B if B % 8 == 0 else _round_up(B, 8)        # at most 7 padded rows
    tm = _largest_divisor_tile(bm, (512, 256, 128, 64, 32, 16, 8))
    return bm, tm


def _n_tiling(n_pad, m_blocks):
    tn = _largest_divisor_tile(n_pad, (512, 256, 128))
    # v7x megacore: if there is only one M block, expose >= 2 blocks along N.
    if m_blocks == 1 and n_pad >= 256:
        half = n_pad // 2
        for c in (512, 256, 128):
            if c <= half and n_pad % c == 0:
                tn = c
                break
    return tn


# ---------------------------------------------------------------------------
# Kernels
# ---------------------------------------------------------------------------

def _head_kernel(x_ref, w_ref, b_ref, o_ref):
    """Single-K-step path: no accumulator scratch, epilogue-free."""
    o_ref[...] = (
        jnp.dot(x_ref[...], w_ref[...], preferred_element_type=jnp.float32)
        + b_ref[...]
    ).astype(o_ref.dtype)


def _head_kernel_ksplit(x_ref, w_ref, b_ref, o_ref, acc_ref):
    """Fallback for very large in_features: K is the last (reduction) grid axis."""
    k = pl.program_id(2)

    @pl.when(k == 0)
    def _():
        acc_ref[...] = jnp.zeros_like(acc_ref)

    acc_ref[...] += jnp.dot(x_ref[...], w_ref[...],
                            preferred_element_type=jnp.float32)

    @pl.when(k == pl.num_programs(2) - 1)
    def _():
        o_ref[...] = (acc_ref[...] + b_ref[...]).astype(o_ref.dtype)


# ---------------------------------------------------------------------------
# Parameter prep (one-time, amortized at init) + forward wrapper
# ---------------------------------------------------------------------------

def fuse_params(w_cat, b_cat, w_brand, b_brand, compute_dtype=jnp.bfloat16):
    """Fuse both heads into a single linear layer: transpose to (F, N_total),
    pad the output dim to a multiple of 128 (lane-dense stores), cast weights to
    the compute dtype (bf16 by default, MXU-native).  Feature dim is NOT padded
    (full-dim K blocks make padding unnecessary in the common path)."""
    n_cat, in_features = w_cat.shape
    n_brd_out = w_brand.shape[0]
    n_total = n_cat + n_brd_out

    w = jnp.concatenate([w_cat, w_brand], axis=0)            # (N_total, F)
    b = jnp.concatenate([b_cat, b_brand], axis=0)            # (N_total,)
    if compute_dtype is not None:
        w = w.astype(compute_dtype)

    n_pad = _round_up(n_total, 128)
    w_t = jnp.transpose(w)                                    # (F, N_total)
    w_t = jnp.pad(w_t, ((0, 0), (0, n_pad - n_total)))
    b_fused = jnp.pad(b, (0, n_pad - n_total)).reshape(1, n_pad).astype(jnp.float32)

    meta = (n_cat, n_brd_out, in_features, n_total)
    return w_t, b_fused, meta


def multilabel_head(x, w_fused_t, b_fused, meta, compute_dtype=jnp.bfloat16):
    """x: (B, in_features).  Returns (cat_logits, brand_logits)."""
    n_cat, n_brd_out, in_features, n_total = meta
    B = x.shape[0]
    out_dtype = x.dtype
    f_w, n_pad = w_fused_t.shape
    assert f_w == in_features

    w = w_fused_t
    if compute_dtype is not None:
        if x.dtype != compute_dtype:
            x = x.astype(compute_dtype)
        if w.dtype != compute_dtype:
            w = w.astype(compute_dtype)
    itemsize = jnp.dtype(x.dtype).itemsize
    out_itemsize = jnp.dtype(out_dtype).itemsize

    bm, tm = _batch_tiling(B)
    m_blocks = bm // tm
    tn = _n_tiling(n_pad, m_blocks)
    n_blocks = n_pad // tn

    x_p = x if bm == B else jnp.pad(x, ((0, bm - B), (0, 0)))

    flops = 2 * B * in_features * n_total
    bytes_accessed = (itemsize * (bm * in_features + in_features * n_pad)
                      + 4 * n_pad + out_itemsize * bm * n_pad)
    cost = pl.CostEstimate(flops=flops, transcendentals=0,
                           bytes_accessed=bytes_accessed)
    vmem_limit = 48 * 1024 * 1024            # safe on v7x (64 MiB physical VMEM)

    # Double-buffered full-K x and w tiles; if this fits comfortably, skip K split.
    fullk_footprint = 2 * itemsize * (tm * in_features + in_features * tn)

    if fullk_footprint <= 16 * 1024 * 1024:
        # --- Common path: single K step, resident weight, no accumulator. ---
        out = pl.pallas_call(
            _head_kernel,
            out_shape=jax.ShapeDtypeStruct((bm, n_pad), out_dtype),
            grid_spec=pltpu.PrefetchScalarGridSpec(
                num_scalar_prefetch=0,
                grid=(m_blocks, n_blocks),
                in_specs=[
                    pl.BlockSpec((tm, in_features), lambda i, j: (i, 0)),  # x
                    pl.BlockSpec((in_features, tn), lambda i, j: (0, j)),  # fused W
                    pl.BlockSpec((1, tn), lambda i, j: (0, j)),            # fused bias
                ],
                out_specs=pl.BlockSpec((tm, tn), lambda i, j: (i, j)),
            ),
            compiler_params=pltpu.CompilerParams(
                dimension_semantics=("parallel", "parallel"),
                vmem_limit_bytes=vmem_limit),
            cost_estimate=cost,
        )(x_p, w, b_fused)
    else:
        # --- Fallback: K-tiled reduction with f32 VMEM accumulator. ---
        f_pad = _round_up(in_features, 128)
        tk = 128
        for c in (2048, 1024, 512, 256, 128):
            if f_pad % c == 0 and 2 * itemsize * (tm * c + c * tn) <= 16 * 1024 * 1024:
                tk = c
                break
        if f_pad != in_features:
            x_p = jnp.pad(x_p, ((0, 0), (0, f_pad - in_features)))
            w = jnp.pad(w, ((0, f_pad - in_features), (0, 0)))
        out = pl.pallas_call(
            _head_kernel_ksplit,
            out_shape=jax.ShapeDtypeStruct((bm, n_pad), out_dtype),
            grid_spec=pltpu.PrefetchScalarGridSpec(
                num_scalar_prefetch=0,
                grid=(m_blocks, n_blocks, f_pad // tk),
                in_specs=[
                    pl.BlockSpec((tm, tk), lambda i, j, k: (i, k)),
                    pl.BlockSpec((tk, tn), lambda i, j, k: (k, j)),
                    pl.BlockSpec((1, tn), lambda i, j, k: (0, j)),
                ],
                out_specs=pl.BlockSpec((tm, tn), lambda i, j, k: (i, j)),
                scratch_shapes=[pltpu.VMEM((tm, tn), jnp.float32)],
            ),
            compiler_params=pltpu.CompilerParams(
                dimension_semantics=("parallel", "parallel", "arbitrary"),
                vmem_limit_bytes=vmem_limit),
            cost_estimate=cost,
        )(x_p, w, b_fused)

    cat_logits = out[:B, :n_cat]
    brand_logits = out[:B, n_cat:n_cat + n_brd_out]
    return cat_logits, brand_logits


def init_params(key, in_features, n_category, n_brand):
    """nn.Linear-style init (fc_brand -> n_category, matching the reference)."""
    k1, k2, k3, k4 = jax.random.split(key, 4)
    bound = 1.0 / jnp.sqrt(in_features)
    w_cat = jax.random.uniform(k1, (n_category, in_features),
                               minval=-bound, maxval=bound, dtype=jnp.float32)
    b_cat = jax.random.uniform(k2, (n_category,),
                               minval=-bound, maxval=bound, dtype=jnp.float32)
    w_brand = jax.random.uniform(k3, (n_category, in_features),
                                 minval=-bound, maxval=bound, dtype=jnp.float32)
    b_brand = jax.random.uniform(k4, (n_category,),
                                 minval=-bound, maxval=bound, dtype=jnp.float32)
    return w_cat, b_cat, w_brand, b_brand


if __name__ == "__main__":
    key = jax.random.PRNGKey(0)
    B, in_features, n_category, n_brand = 2, 32, 8, 5

    kx, kp = jax.random.split(key)
    x = jax.random.normal(kx, (B, in_features), dtype=jnp.float32)
    w_cat, b_cat, w_brand, b_brand = init_params(kp, in_features, n_category, n_brand)

    # One-time parameter fusion / transpose / padding (not paid per forward call).
    w_fused_t, b_fused, meta = fuse_params(w_cat, b_cat, w_brand, b_brand,
                                           compute_dtype=jnp.bfloat16)

    cat_logits, brand_logits = multilabel_head(x, w_fused_t, b_fused, meta,
                                               compute_dtype=jnp.bfloat16)
    jax.block_until_ready((cat_logits, brand_logits))

    assert cat_logits.shape == (B, n_category)
    assert brand_logits.shape == (B, n_category)   # reference fc_brand -> n_category

    # Strict check against the bf16-rounded reference (same rounding as the kernel,
    # f32 accumulation on both sides).
    xr = x.astype(jnp.bfloat16).astype(jnp.float32)
    wcr = w_cat.astype(jnp.bfloat16).astype(jnp.float32)
    wbr = w_brand.astype(jnp.bfloat16).astype(jnp.float32)
    cat_ref_bf16 = xr @ wcr.T + b_cat
    brand_ref_bf16 = xr @ wbr.T + b_brand
    assert jnp.allclose(cat_logits, cat_ref_bf16, atol=1e-3, rtol=1e-3)
    assert jnp.allclose(brand_logits, brand_ref_bf16, atol=1e-3, rtol=1e-3)

    # Coarse check against the full-precision reference (bf16 quantization noise).
    cat_ref = x @ w_cat.T + b_cat
    brand_ref = x @ w_brand.T + b_brand
    assert jnp.allclose(cat_logits, cat_ref, atol=1e-1, rtol=1e-1)
    assert jnp.allclose(brand_logits, brand_ref, atol=1e-1, rtol=1e-1)

    print("KERNEL_OK")
</pallas_src>

<mosaic_0001>
module attributes {stable_mosaic.version = 11 : i64} {
  func.func @_head_kernel(%arg0: i32, %arg1: i32, %arg2: memref<2x32xbf16, #tpu.memory_space<vmem>>, %arg3: memref<32x128xbf16, #tpu.memory_space<vmem>>, %arg4: memref<1x128xf32, #tpu.memory_space<vmem>>, %arg5: memref<2x128xf32, #tpu.memory_space<vmem>>) attributes {dimension_semantics = [#tpu.dimension_semantics<parallel>, #tpu.dimension_semantics<parallel>], iteration_bounds = array<i64: 1, 1>, scalar_prefetch = 0 : i64, scratch_operands = 0 : i64, tpu.core_type = #tpu.core_type<tc>, window_params = [{transform_indices = @transform_0, window_bounds = array<i64: 2, 32>}, {transform_indices = @transform_1, window_bounds = array<i64: 32, 128>}, {transform_indices = @transform_2, window_bounds = array<i64: 1, 128>}, {transform_indices = @transform_3, window_bounds = array<i64: 2, 128>}]} {
    %c0 = arith.constant 0 : index
    %c0_0 = arith.constant 0 : index
    %0 = vector.load %arg2[%c0, %c0_0] : memref<2x32xbf16, #tpu.memory_space<vmem>>, vector<2x32xbf16>
    %c0_1 = arith.constant 0 : index
    %c0_2 = arith.constant 0 : index
    %1 = vector.load %arg3[%c0_1, %c0_2] : memref<32x128xbf16, #tpu.memory_space<vmem>>, vector<32x128xbf16>
    %cst = arith.constant dense<0.000000e+00> : vector<2x128xf32>
    %2 = tpu.matmul %0, %1, %cst {dimension_numbers = #tpu.dot_dimension_numbers<[1], [0], [0], [1], [0, 0, 1, 1], [], []>} : vector<2x32xbf16>, vector<32x128xbf16>, vector<2x128xf32> -> vector<2x128xf32>
    %c0_3 = arith.constant 0 : index
    %c0_4 = arith.constant 0 : index
    %3 = vector.load %arg4[%c0_3, %c0_4] : memref<1x128xf32, #tpu.memory_space<vmem>>, vector<1x128xf32>
    %4 = vector.broadcast %3 : vector<1x128xf32> to vector<2x128xf32>
    %5 = arith.addf %2, %4 : vector<2x128xf32>
    %c0_5 = arith.constant 0 : index
    %c0_6 = arith.constant 0 : index
    %6 = vector.load %arg5[%c0_5, %c0_6] : memref<2x128xf32, #tpu.memory_space<vmem>>, vector<2x128xf32>
    tpu.vector_store %arg5[%c0_5, %c0_6], %5 {strides = array<i32>} : memref<2x128xf32, #tpu.memory_space<vmem>>, vector<2x128xf32>,
    return
  }
  func.func @transform_0(%arg0: i32, %arg1: i32) -> (i32, i32) {
    %c0_i32 = arith.constant 0 : i32
    %c0_i32_0 = arith.constant 0 : i32
    return %arg0, %c0_i32 : i32, i32
  }
  func.func @transform_1(%arg0: i32, %arg1: i32) -> (i32, i32) {
    %c0_i32 = arith.constant 0 : i32
    %c0_i32_0 = arith.constant 0 : i32
    return %c0_i32, %arg1 : i32, i32
  }
  func.func @transform_2(%arg0: i32, %arg1: i32) -> (i32, i32) {
    %c0_i32 = arith.constant 0 : i32
    %c0_i32_0 = arith.constant 0 : i32
    return %c0_i32, %arg1 : i32, i32
  }
  func.func @transform_3(%arg0: i32, %arg1: i32) -> (i32, i32) {
    %c0_i32 = arith.constant 0 : i32
    return %arg0, %arg1 : i32, i32
  }
}

</mosaic_0001>

<llo_original>
// kernel: tpu_custom_call.1
$region0: #{tpu_custom_call.1}
  #allocation0 [shape = 'u32[]', space=smem, size = 0x4, offset = 0x4, fixed_abs, tag = 'smem constant byte address 0x4 - core index']
  #allocation1 [shape = 'u32[144,128]{1,0:T(1,128)}', space=vmem, size = 0x12000, scoped, tag = 'internal scratch']
  %s0 = inlined_call_operand.hbm [shape: bf16[2,32], index: 0, kind: input, shape index: {}]
  %s1 = inlined_call_operand.hbm [shape: bf16[32,128], index: 1, kind: input, shape index: {}]
  %s2 = inlined_call_operand.vmem [shape: f32[1,128], index: 2, kind: input, shape index: {}]
  %s3 = inlined_call_operand.hbm [shape: f32[2,128], index: 3, kind: output, shape index: {}]
  %s4 = sld [smem:[#allocation0]]
  $region30: #{tpu_custom_call.1} parent=0
    _
  %s6 = ssub.s32 1, %s4
  %s7 = scalar_select 0, %s6, %s4
  $region1: #{tpu_custom_call.1} parent=0
    #allocation2 [shape = 'u8[512]{0}', space=vmem, size = 0x400, scoped, tag = 'input window, operand 0, single buffered']
    #allocation3 [shape = 's32[1]{0}', space=sflag, size = 0x4, scoped, tag = 'scoped memory for tpu_custom_call.1']
    #allocation4 [shape = 's32[1]{0}', space=sflag, size = 0x4, scoped, tag = 'scoped memory for tpu_custom_call.1']
    #allocation5 [shape = 'u8[8192]{0}', space=vmem, size = 0x2000, scoped, tag = 'input window, operand 1, single buffered']
    #allocation6 [shape = 's32[1]{0}', space=sflag, size = 0x4, scoped, tag = 'scoped memory for tpu_custom_call.1']
    #allocation7 [shape = 'u8[1024]{0}', space=vmem, size = 0x400, scoped, tag = 'output window, operand 0, single buffered']
    %8 = vsyncpa [#allocation3], 0
    %9 = vsyncpa [#allocation6], 0
    %10 = vsyncpa [#allocation4], 0
    // Predicated region
    $region2: #{tpu_custom_call.1} parent=1 // pred_check
      _
    $region3: #{tpu_custom_call.1} parent=1 // pred_check_branch
      %12 = sbr.rel (0) target = $region5
    $region4: #{tpu_custom_call.1} parent=1 // pred_region
      %s14 = ssub.s32 16, 16
      %15 = vsyncadd [#allocation3], %s14
      %s17 = sshll.u32 [#allocation2], 4
      %s18 = int_to_ptr.vmem [resolvable:$true] %s17
      %20 = dma.hbm_to_vmem [thread:$0]  %s0, 16, %s18, [#allocation3]
    $region5: #{tpu_custom_call.1} parent=1 // pred_fallthru
      _
    // Predicated region
    $region6: #{tpu_custom_call.1} parent=1 // pred_check
      _
    $region7: #{tpu_custom_call.1} parent=1 // pred_check_branch
      %22 = sbr.rel (0) target = $region9
    $region8: #{tpu_custom_call.1} parent=1 // pred_region
      %s24 = ssub.s32 256, 256
      %25 = vsyncadd [#allocation6], %s24
      %s26 = sshll.u32 [#allocation5], 4
      %s27 = int_to_ptr.vmem [resolvable:$true] %s26
      %32 = dma.hbm_to_vmem [thread:$0]  %s1, 256, %s27, [#allocation6], 64, 64, 4
    $region9: #{tpu_custom_call.1} parent=1 // pred_fallthru
      _
    // Predicated region
    $region10: #{tpu_custom_call.1} parent=1 // pred_check
      _
    $region11: #{tpu_custom_call.1} parent=1 // pred_check_branch
      %34 = sbr.rel (0) target = $region13
    $region12: #{tpu_custom_call.1} parent=1 // pred_region
      _
    $region13: #{tpu_custom_call.1} parent=1 // pred_fallthru
      _
    // Predicated region
    $region14: #{tpu_custom_call.1} parent=1 // pred_check
      _
    $region15: #{tpu_custom_call.1} parent=1 // pred_check_branch
      %36 = sbr.rel (0) target = $region17
    $region16: #{tpu_custom_call.1} parent=1 // pred_region
      %37 = dma.done [#allocation3], 16
    $region17: #{tpu_custom_call.1} parent=1 // pred_fallthru
      _
    // Predicated region
    $region18: #{tpu_custom_call.1} parent=1 // pred_check
      _
    $region19: #{tpu_custom_call.1} parent=1 // pred_check_branch
      %39 = sbr.rel (0) target = $region21
    $region20: #{tpu_custom_call.1} parent=1 // pred_region
      %40 = dma.done [#allocation6], 256
    $region21: #{tpu_custom_call.1} parent=1 // pred_fallthru
      _
    %v42 = vld [vmem:[#allocation2] sm:$0x1]
    %v43 = vld [vmem:[#allocation5] sm:$0xf]
    %v44 = vld [vmem:[#allocation5 + $0x4] sm:$0xf]
    %v45 = vld [vmem:[#allocation5 + $0x8] sm:$0xf]
    %v46 = vld [vmem:[#allocation5 + $0xc] sm:$0xf]
    %v47 = vld [vmem:[%s2] sm:$0x1]
    %v49 = vlaneseq
    %v50 = vshrl.u32 %v49, 7
    %v51 = vsub.s32 0, %v50
    %v52 = vrot.slane %v47, %v51
    %v58 = vunpack.c.l.b16 %v43
    %v59 = vunpack.c.l.b16 %v44
    %v60 = vunpack.c.l.b16 %v45
    %v61 = vunpack.c.l.b16 %v46
    %v62 = vpack.c.b16 %v59, %v58
    %v63 = vpack.c.b16 %v61, %v60
    %vm66 = vcmask 261120
    %v68 = vsel %vm66, %v42, 0
    %70 = vmatprep.subr.bf16.mxu0 0
    %71 = vmatpush1.bf16.msra.mxu0 %v62
    %72 = vmatprep.subr.bf16.mxu0 0
    %73 = vmatpush1.bf16.msra.mxu0 %v63
    %74 = vmatprep.subr.bf16.mxu0 0
    %75 = vmatpush1.bf16.msra.mxu0 0
    %76 = vmatprep.subr.bf16.mxu0 0
    %77 = vmatpush1.bf16.msra.mxu0 0
    %78 = vmatprep.subr.bf16.mxu0 0
    %79 = vmatpush1.bf16.msra.mxu0 0
    %80 = vmatprep.subr.bf16.mxu0 0
    %81 = vmatpush1.bf16.msra.mxu0 0
    %82 = vmatprep.subr.bf16.mxu0 0
    %83 = vmatpush1.bf16.msra.mxu0 0
    %84 = vmatprep.subr.bf16.mxu0 0
    %85 = vmatpush1.bf16.msra.mxu0 0
    %86 = vmatprep.subr.bf16.mxu0 0
    %87 = vmatpush1.bf16.msra.mxu0 0
    %88 = vmatprep.subr.bf16.mxu0 0
    %89 = vmatpush1.bf16.msra.mxu0 0
    %90 = vmatprep.subr.bf16.mxu0 0
    %91 = vmatpush1.bf16.msra.mxu0 0
    %92 = vmatprep.subr.bf16.mxu0 0
    %93 = vmatpush1.bf16.msra.mxu0 0
    %94 = vmatprep.subr.bf16.mxu0 0
    %95 = vmatpush1.bf16.msra.mxu0 0
    %96 = vmatprep.subr.bf16.mxu0 0
    %97 = vmatpush1.bf16.msra.mxu0 0
    %98 = vmatprep.subr.bf16.mxu0 0
    %99 = vmatpush1.bf16.msra.mxu0 0
    %100 = vmatprep.subr.bf16.mxu0 0
    %101 = vmatpush1.bf16.msra.mxu0 0
    %102 = vmatprep.mubr.bf16.mxu0 0
    %103 = vmatmul.mubr.bf16.gmra.mrb[0].mxu0 %v68
    %v104 = vpop.f32.mrb[0].mxu0
    %v105 = vadd.f32 %v52, %v104
    %v106 = vpop.f32.mrb[0].mxu0
    %v107 = vpop.f32.mrb[0].mxu0
    %v108 = vpop.f32.mrb[0].mxu0
    %109 = vdwg.mxu0
    %110 = vst [vmem:[#allocation7] sm:$0x3] %v105
    // Predicated region
    $region22: #{tpu_custom_call.1} parent=1 // pred_check
      _
    $region23: #{tpu_custom_call.1} parent=1 // pred_check_branch
      %112 = sbr.rel (0) target = $region25
    $region24: #{tpu_custom_call.1} parent=1 // pred_region
      %s114 = ssub.s32 32, 32
      %115 = vsyncadd [#allocation4], %s114
      %s117 = sshll.u32 [#allocation7], 4
      %s118 = int_to_ptr.vmem [resolvable:$true] %s117
      %120 = dma.vmem_to_hbm [thread:$0]  %s118, 32, %s3, [#allocation4]
    $region25: #{tpu_custom_call.1} parent=1 // pred_fallthru
      _
    // Predicated region
    $region26: #{tpu_custom_call.1} parent=1 // pred_check
      _
    $region27: #{tpu_custom_call.1} parent=1 // pred_check_branch
      %122 = sbr.rel (0) target = $region29
    $region28: #{tpu_custom_call.1} parent=1 // pred_region
      %123 = dma.done [#allocation4], 32
    $region29: #{tpu_custom_call.1} parent=1 // pred_fallthru
      _
    %124 = vsyncpa [#allocation3], 1
    %125 = vsyncpa [#allocation6], 1
    %126 = vsyncpa [#allocation4], 1

</llo_original>
